<compile_context>
chip_gen: v7x
topology: tpu7x:2x2x1
jax: 0.10.0
libtpu: 0.0.40
codegen_flags: <defaults>
</compile_context>

<pallas_src>
import functools

import jax
import jax.numpy as jnp
import numpy as np
from jax.experimental import pallas as pl
from jax.experimental.pallas import tpu as pltpu

LANE = 128
SUBLANE = 8


def _round_up(x: int, m: int) -> int:
    return ((x + m - 1) // m) * m


def _make_mlp_kernel(num_layers: int, i_pad: int, a_pad: int, bias_row: int,
                     k_pads: tuple):
    """MLP kernel: (obs, act, packed weight/bias slab) -> (1, d_pad) output.

    All weight reads are static slices of the slab Ref (zero-cost views), so
    each vld is placed right next to the dot that consumes it and no padded
    rows are ever loaded.
    """

    def kernel(obs_ref, act_ref, wb_ref, o_ref):
        # ---- layer 0: fused concat via split matmul (8-aligned row slices) --
        h = (
            jnp.dot(obs_ref[...], wb_ref[0, :i_pad, :],
                    preferred_element_type=jnp.float32)
            + jnp.dot(act_ref[...], wb_ref[0, i_pad:i_pad + a_pad, :],
                      preferred_element_type=jnp.float32)
            + wb_ref[0, bias_row:bias_row + 1, :]
        )
        h = jnp.maximum(h, 0.0)

        # ---- remaining layers: contract only the real (padded-to-8) rows ----
        for layer in range(1, num_layers):
            k = k_pads[layer - 1]                       # static per-layer K
            h = (
                jnp.dot(h[:, :k], wb_ref[layer, :k, :],
                        preferred_element_type=jnp.float32)
                + wb_ref[layer, bias_row:bias_row + 1, :]
            )
            if layer < num_layers - 1:                  # ReLU between hidden layers only
                h = jnp.maximum(h, 0.0)

        o_ref[...] = h                                  # lane-dense (1, d_pad) store

    return kernel


def pack_params(params, i_size: int, a_dim: int):
    """Pack [(W (in,out), b (out,)), ...] into one compact lane-padded f32 slab.

    Slab shape: (L, rows_w + 8, d_pad) with
      rows_w  = round_up(max real f_in (with layer-0 act rows 8-aligned), 8)
      d_pad   = round_up(max f_out, 128)
      slab[0, :i_size, :]                 = W0[:i_size]      (obs rows)
      slab[0, i_pad:i_pad + a_dim, :]     = W0[i_size:]      (act rows, 8-aligned start)
      slab[l, :f_in_l, :]                 = W_l  (l >= 1)
      slab[l, rows_w, :f_out_l]           = b_l
    Zero padding is exact: padded rows/lanes stay 0 through matmul+bias+ReLU.
    Built once (NumPy, outside the per-call path).
    """
    num_layers = len(params)
    i_pad = _round_up(i_size, SUBLANE)
    a_pad = _round_up(a_dim, SUBLANE)

    max_out = max(w.shape[1] for w, _ in params)
    d_pad = _round_up(max_out, LANE)

    row_need = i_pad + a_pad
    for w, _ in params[1:]:
        row_need = max(row_need, _round_up(w.shape[0], SUBLANE))
    rows_w = _round_up(row_need, SUBLANE)
    bias_row = rows_w
    total_rows = rows_w + SUBLANE

    slab = np.zeros((num_layers, total_rows, d_pad), np.float32)

    w0, b0 = params[0]
    f_out0 = w0.shape[1]
    w0 = np.asarray(w0, np.float32)
    slab[0, :i_size, :f_out0] = w0[:i_size]
    slab[0, i_pad:i_pad + a_dim, :f_out0] = w0[i_size:]
    slab[0, bias_row, :f_out0] = np.asarray(b0, np.float32)

    for l in range(1, num_layers):
        w, b = params[l]
        f_in, f_out = w.shape
        slab[l, :f_in, :f_out] = np.asarray(w, np.float32)
        slab[l, bias_row, :f_out] = np.asarray(b, np.float32)

    meta = dict(
        i_pad=i_pad,
        a_pad=a_pad,
        d_pad=d_pad,
        bias_row=bias_row,
        k_pads=tuple(_round_up(w.shape[0], SUBLANE) for w, _ in params[1:]),
    )
    return jnp.asarray(slab), meta


def td3_value_forward(observation, action, wb_slab, *, i_size, a_dim,
                      num_layers, i_pad, a_pad, d_pad, bias_row, k_pads):
    """Single-sample forward; returns shape (1,) like the PyTorch module."""
    obs2 = observation.reshape(1, i_size).astype(jnp.float32)
    act2 = action.reshape(1, a_dim).astype(jnp.float32)
    # Zero-pad to 8-aligned widths so every weight-ref slice starts at an
    # aligned sublane (no-ops here: i_pad==i_size, a_pad==a_dim).
    if i_pad != i_size:
        obs2 = jnp.pad(obs2, ((0, 0), (0, i_pad - i_size)))
    if a_pad != a_dim:
        act2 = jnp.pad(act2, ((0, 0), (0, a_pad - a_dim)))

    vmem = pl.BlockSpec(memory_space=pltpu.MemorySpace.VMEM)
    out = pl.pallas_call(
        _make_mlp_kernel(num_layers, i_pad, a_pad, bias_row, k_pads),
        out_shape=jax.ShapeDtypeStruct((1, d_pad), jnp.float32),
        in_specs=[vmem, vmem, vmem],
        out_specs=vmem,
    )(obs2, act2, wb_slab)

    # Column 0 of the lane-dense output slab is the scalar value (this slice
    # lives inside the same jit'd executable — no extra dispatch).
    return out[0, :1]


def init_params(key, i_size, a_dim, hidden_sizes):
    """Synthetic init mirroring the module's layer shapes (W stored as (in, out))."""
    dims = [i_size + a_dim] + list(hidden_sizes) + [1]
    params = []
    for li in range(len(dims) - 1):
        f_in, f_out = dims[li], dims[li + 1]
        key, kw, kb = jax.random.split(key, 3)
        bound = 1.0 / np.sqrt(f_in)
        w = jax.random.uniform(kw, (f_in, f_out), jnp.float32, -bound, bound)
        if li == len(dims) - 2:
            b = jax.random.uniform(kb, (f_out,), jnp.float32, -bound, bound)
        else:
            b = jnp.zeros((f_out,), jnp.float32)  # nn.init.zeros_ on hidden biases
        params.append((w, b))
    return params


def reference_forward(observation, action, params):
    fv = jnp.concatenate([observation, action], axis=0).astype(jnp.float32)
    h = fv
    for i, (w, b) in enumerate(params):
        h = h @ w + b
        if i < len(params) - 1:
            h = jnp.maximum(h, 0.0)
    return h


if __name__ == "__main__":
    i_size = 24
    a_dim = 8
    hidden_sizes = (32, 32)

    key = jax.random.PRNGKey(0)
    key, k_obs, k_act, k_par = jax.random.split(key, 4)
    observation = jax.random.normal(k_obs, (i_size,), jnp.float32)
    action = jax.random.normal(k_act, (a_dim,), jnp.float32)
    params = init_params(k_par, i_size, a_dim, hidden_sizes)

    # Pack weights/biases ONCE into a compact (L, 40, 128) slab.
    wb_slab, meta = pack_params(params, i_size, a_dim)

    fwd = jax.jit(
        functools.partial(
            td3_value_forward,
            i_size=i_size,
            a_dim=a_dim,
            num_layers=len(params),
            **meta,
        )
    )

    value = fwd(observation, action, wb_slab)
    jax.block_until_ready(value)

    ref = reference_forward(observation, action, params)
    assert value.shape == (1,), value.shape
    np.testing.assert_allclose(np.asarray(value), np.asarray(ref),
                               rtol=1e-5, atol=1e-5)

    print("KERNEL_OK")
</pallas_src>

<mosaic_0001>
module attributes {stable_mosaic.version = 11 : i64} {
  func.func @kernel(%arg0: memref<1x24xf32, #tpu.memory_space<vmem>>, %arg1: memref<1x8xf32, #tpu.memory_space<vmem>>, %arg2: memref<3x40x128xf32, #tpu.memory_space<vmem>>, %arg3: memref<1x128xf32, #tpu.memory_space<vmem>>) attributes {dimension_semantics = [], scalar_prefetch = 0 : i64, scratch_operands = 0 : i64, tpu.core_type = #tpu.core_type<tc>} {
    %c0 = arith.constant 0 : index
    %c0_0 = arith.constant 0 : index
    %0 = vector.load %arg0[%c0, %c0_0] : memref<1x24xf32, #tpu.memory_space<vmem>>, vector<1x24xf32>
    %c0_1 = arith.constant 0 : index
    %c0_2 = arith.constant 0 : index
    %c0_3 = arith.constant 0 : index
    %1 = vector.load %arg2[%c0_1, %c0_2, %c0_3] : memref<3x40x128xf32, #tpu.memory_space<vmem>>, vector<1x24x128xf32>
    %2 = vector.shape_cast %1 : vector<1x24x128xf32> to vector<24x128xf32>
    %cst = arith.constant dense<0.000000e+00> : vector<1x128xf32>
    %3 = tpu.matmul %0, %2, %cst {dimension_numbers = #tpu.dot_dimension_numbers<[1], [0], [0], [1], [0, 0, 1, 1], [], []>} : vector<1x24xf32>, vector<24x128xf32>, vector<1x128xf32> -> vector<1x128xf32>
    %c0_4 = arith.constant 0 : index
    %c0_5 = arith.constant 0 : index
    %4 = vector.load %arg1[%c0_4, %c0_5] : memref<1x8xf32, #tpu.memory_space<vmem>>, vector<1x8xf32>
    %c0_6 = arith.constant 0 : index
    %c24 = arith.constant 24 : index
    %c0_7 = arith.constant 0 : index
    %5 = vector.load %arg2[%c0_6, %c24, %c0_7] : memref<3x40x128xf32, #tpu.memory_space<vmem>>, vector<1x8x128xf32>
    %6 = vector.shape_cast %5 : vector<1x8x128xf32> to vector<8x128xf32>
    %cst_8 = arith.constant dense<0.000000e+00> : vector<1x128xf32>
    %7 = tpu.matmul %4, %6, %cst_8 {dimension_numbers = #tpu.dot_dimension_numbers<[1], [0], [0], [1], [0, 0, 1, 1], [], []>} : vector<1x8xf32>, vector<8x128xf32>, vector<1x128xf32> -> vector<1x128xf32>
    %8 = arith.addf %3, %7 : vector<1x128xf32>
    %c0_9 = arith.constant 0 : index
    %c32 = arith.constant 32 : index
    %c0_10 = arith.constant 0 : index
    %9 = vector.load %arg2[%c0_9, %c32, %c0_10] : memref<3x40x128xf32, #tpu.memory_space<vmem>>, vector<1x1x128xf32>
    %10 = vector.shape_cast %9 : vector<1x1x128xf32> to vector<1x128xf32>
    %11 = arith.addf %8, %10 : vector<1x128xf32>
    %cst_11 = arith.constant 0.000000e+00 : f32
    %12 = vector.broadcast %cst_11 : f32 to vector<1x128xf32>
    %13 = arith.maximumf %11, %12 : vector<1x128xf32>
    %14 = vector.extract_strided_slice %13 {offsets = [0, 0], sizes = [1, 32], strides = [1, 1]} : vector<1x128xf32> to vector<1x32xf32>
    %c1 = arith.constant 1 : index
    %c0_12 = arith.constant 0 : index
    %c0_13 = arith.constant 0 : index
    %15 = vector.load %arg2[%c1, %c0_12, %c0_13] : memref<3x40x128xf32, #tpu.memory_space<vmem>>, vector<1x32x128xf32>
    %16 = vector.shape_cast %15 : vector<1x32x128xf32> to vector<32x128xf32>
    %cst_14 = arith.constant dense<0.000000e+00> : vector<1x128xf32>
    %17 = tpu.matmul %14, %16, %cst_14 {dimension_numbers = #tpu.dot_dimension_numbers<[1], [0], [0], [1], [0, 0, 1, 1], [], []>} : vector<1x32xf32>, vector<32x128xf32>, vector<1x128xf32> -> vector<1x128xf32>
    %c1_15 = arith.constant 1 : index
    %c32_16 = arith.constant 32 : index
    %c0_17 = arith.constant 0 : index
    %18 = vector.load %arg2[%c1_15, %c32_16, %c0_17] : memref<3x40x128xf32, #tpu.memory_space<vmem>>, vector<1x1x128xf32>
    %19 = vector.shape_cast %18 : vector<1x1x128xf32> to vector<1x128xf32>
    %20 = arith.addf %17, %19 : vector<1x128xf32>
    %cst_18 = arith.constant 0.000000e+00 : f32
    %21 = vector.broadcast %cst_18 : f32 to vector<1x128xf32>
    %22 = arith.maximumf %20, %21 : vector<1x128xf32>
    %23 = vector.extract_strided_slice %22 {offsets = [0, 0], sizes = [1, 32], strides = [1, 1]} : vector<1x128xf32> to vector<1x32xf32>
    %c2 = arith.constant 2 : index
    %c0_19 = arith.constant 0 : index
    %c0_20 = arith.constant 0 : index
    %24 = vector.load %arg2[%c2, %c0_19, %c0_20] : memref<3x40x128xf32, #tpu.memory_space<vmem>>, vector<1x32x128xf32>
    %25 = vector.shape_cast %24 : vector<1x32x128xf32> to vector<32x128xf32>
    %cst_21 = arith.constant dense<0.000000e+00> : vector<1x128xf32>
    %26 = tpu.matmul %23, %25, %cst_21 {dimension_numbers = #tpu.dot_dimension_numbers<[1], [0], [0], [1], [0, 0, 1, 1], [], []>} : vector<1x32xf32>, vector<32x128xf32>, vector<1x128xf32> -> vector<1x128xf32>
    %c2_22 = arith.constant 2 : index
    %c32_23 = arith.constant 32 : index
    %c0_24 = arith.constant 0 : index
    %27 = vector.load %arg2[%c2_22, %c32_23, %c0_24] : memref<3x40x128xf32, #tpu.memory_space<vmem>>, vector<1x1x128xf32>
    %28 = vector.shape_cast %27 : vector<1x1x128xf32> to vector<1x128xf32>
    %29 = arith.addf %26, %28 : vector<1x128xf32>
    %c0_25 = arith.constant 0 : index
    %c0_26 = arith.constant 0 : index
    %30 = vector.load %arg3[%c0_25, %c0_26] : memref<1x128xf32, #tpu.memory_space<vmem>>, vector<1x128xf32>
    tpu.vector_store %arg3[%c0_25, %c0_26], %29 {strides = array<i32>} : memref<1x128xf32, #tpu.memory_space<vmem>>, vector<1x128xf32>,
    return
  }
}

</mosaic_0001>

<llo_original>
// kernel: td3_value_forward.1
$region0: #{td3_value_forward.1}
  #allocation0 [shape = 'u32[]', space=smem, size = 0x4, offset = 0x4, fixed_abs, tag = 'smem constant byte address 0x4 - core index']
  #allocation1 [shape = 'u32[144,128]{1,0:T(1,128)}', space=vmem, size = 0x12000, scoped, tag = 'internal scratch']
  %s0 = inlined_call_operand.vmem [shape: f32[1,24], index: 0, kind: input, shape index: {}]
  %s1 = inlined_call_operand.vmem [shape: f32[1,8], index: 1, kind: input, shape index: {}]
  %s2 = inlined_call_operand.hbm [shape: f32[3,40,128], index: 2, kind: input, shape index: {}]
  %s3 = inlined_call_operand.hbm [shape: f32[1,128], index: 3, kind: output, shape index: {}]
  %s4 = sld [smem:[#allocation0]]
  $region26: #{td3_value_forward.1} parent=0
    _
  %s6 = ssub.s32 1, %s4
  %s7 = scalar_select 0, %s6, %s4
  $region1: #{td3_value_forward.1} parent=0
    #allocation2 [shape = 'u8[61440]{0}', space=vmem, size = 0xf000, scoped, tag = 'input window, operand 2, single buffered']
    #allocation3 [shape = 's32[1]{0}', space=sflag, size = 0x4, scoped, tag = 'scoped memory for td3_value_forward.1']
    #allocation4 [shape = 's32[1]{0}', space=sflag, size = 0x4, scoped, tag = 'scoped memory for td3_value_forward.1']
    #allocation5 [shape = 'u8[512]{0}', space=vmem, size = 0x400, scoped, tag = 'output window, operand 0, single buffered']
    %8 = vsyncpa [#allocation3], 0
    %9 = vsyncpa [#allocation4], 0
    // Predicated region
    $region2: #{td3_value_forward.1} parent=1 // pred_check
      _
    $region3: #{td3_value_forward.1} parent=1 // pred_check_branch
      %11 = sbr.rel (0) target = $region5
    $region4: #{td3_value_forward.1} parent=1 // pred_region
      _
    $region5: #{td3_value_forward.1} parent=1 // pred_fallthru
      _
    // Predicated region
    $region6: #{td3_value_forward.1} parent=1 // pred_check
      _
    $region7: #{td3_value_forward.1} parent=1 // pred_check_branch
      %13 = sbr.rel (0) target = $region9
    $region8: #{td3_value_forward.1} parent=1 // pred_region
      _
    $region9: #{td3_value_forward.1} parent=1 // pred_fallthru
      _
    // Predicated region
    $region10: #{td3_value_forward.1} parent=1 // pred_check
      _
    $region11: #{td3_value_forward.1} parent=1 // pred_check_branch
      %15 = sbr.rel (0) target = $region13
    $region12: #{td3_value_forward.1} parent=1 // pred_region
      %s17 = ssub.s32 1920, 1920
      %18 = vsyncadd [#allocation3], %s17
      %s19 = sshll.u32 [#allocation2], 4
      %s20 = int_to_ptr.vmem [resolvable:$true] %s19
      %25 = dma.hbm_to_vmem [thread:$0]  %s2, 1920, %s20, [#allocation3], 128, 128, 8
    $region13: #{td3_value_forward.1} parent=1 // pred_fallthru
      _
    // Predicated region
    $region14: #{td3_value_forward.1} parent=1 // pred_check
      _
    $region15: #{td3_value_forward.1} parent=1 // pred_check_branch
      %27 = sbr.rel (0) target = $region17
    $region16: #{td3_value_forward.1} parent=1 // pred_region
      %28 = dma.done [#allocation3], 1920
    $region17: #{td3_value_forward.1} parent=1 // pred_fallthru
      _
    %v29 = vld [vmem:[%s0] sm:$0x1]
    %v30 = vld [vmem:[#allocation2] sm:$0xff]
    %v31 = vld [vmem:[#allocation2 + $0x8] sm:$0xff]
    %v32 = vld [vmem:[#allocation2 + $0x10] sm:$0xff]
    %v33 = vld [vmem:[%s1] sm:$0x1]
    %v34 = vld [vmem:[#allocation2 + $0x18] sm:$0xff]
    %vm35 = vcmask 64512
    %v37 = vsel %vm35, %v33, 0
    %39 = vmatprep.subr.mxu0 0.0
    %40 = vmatpush1.msra.mxu0 %v34
    %41 = vmatprep.subr.mxu0 0.0
    %42 = vmatpush1.msra.mxu0 0.0
    %43 = vmatprep.subr.mxu0 0.0
    %44 = vmatpush1.msra.mxu0 0.0
    %45 = vmatprep.subr.mxu0 0.0
    %46 = vmatpush1.msra.mxu0 0.0
    %47 = vmatprep.subr.mxu0 0.0
    %48 = vmatpush1.msra.mxu0 0.0
    %49 = vmatprep.subr.mxu0 0.0
    %50 = vmatpush1.msra.mxu0 0.0
    %51 = vmatprep.subr.mxu0 0.0
    %52 = vmatpush1.msra.mxu0 0.0
    %53 = vmatprep.subr.mxu0 0.0
    %54 = vmatpush1.msra.mxu0 0.0
    %55 = vmatprep.subr.mxu0 0.0
    %56 = vmatpush1.msra.mxu0 0.0
    %57 = vmatprep.subr.mxu0 0.0
    %58 = vmatpush1.msra.mxu0 0.0
    %59 = vmatprep.subr.mxu0 0.0
    %60 = vmatpush1.msra.mxu0 0.0
    %61 = vmatprep.subr.mxu0 0.0
    %62 = vmatpush1.msra.mxu0 0.0
    %63 = vmatprep.subr.mxu0 0.0
    %64 = vmatpush1.msra.mxu0 0.0
    %65 = vmatprep.subr.mxu0 0.0
    %66 = vmatpush1.msra.mxu0 0.0
    %67 = vmatprep.subr.mxu0 0.0
    %68 = vmatpush1.msra.mxu0 0.0
    %69 = vmatprep.subr.mxu0 0.0
    %70 = vmatpush1.msra.mxu0 0.0
    %71 = vmatprep.subr.mxu0 0.0
    %72 = vmatpush1.msra.mxu0 0.0
    %73 = vmatprep.subr.mxu0 0.0
    %74 = vmatpush1.msra.mxu0 0.0
    %75 = vmatprep.subr.mxu0 0.0
    %76 = vmatpush1.msra.mxu0 0.0
    %77 = vmatprep.subr.mxu0 0.0
    %78 = vmatpush1.msra.mxu0 0.0
    %79 = vmatprep.subr.mxu0 0.0
    %80 = vmatpush1.msra.mxu0 0.0
    %81 = vmatprep.subr.mxu0 0.0
    %82 = vmatpush1.msra.mxu0 0.0
    %83 = vmatprep.subr.mxu0 0.0
    %84 = vmatpush1.msra.mxu0 0.0
    %85 = vmatprep.subr.mxu0 0.0
    %86 = vmatpush1.msra.mxu0 0.0
    %87 = vmatprep.subr.mxu0 0.0
    %88 = vmatpush1.msra.mxu0 0.0
    %89 = vmatprep.subr.mxu0 0.0
    %90 = vmatpush1.msra.mxu0 0.0
    %91 = vmatprep.subr.mxu0 0.0
    %92 = vmatpush1.msra.mxu0 0.0
    %93 = vmatprep.subr.mxu0 0.0
    %94 = vmatpush1.msra.mxu0 0.0
    %95 = vmatprep.subr.mxu0 0.0
    %96 = vmatpush1.msra.mxu0 0.0
    %97 = vmatprep.subr.mxu0 0.0
    %98 = vmatpush1.msra.mxu0 0.0
    %99 = vmatprep.subr.mxu0 0.0
    %100 = vmatpush1.msra.mxu0 0.0
    %101 = vmatprep.subr.mxu0 0.0
    %102 = vmatpush1.msra.mxu0 0.0
    %103 = vmatprep.mubr.f32.mxu0 0.0
    %104 = vmatmul.mubr.f32.gmra.mrb[0].mxu0 %v37
    %v105 = vpop.f32.mrb[0].mxu0
    %v106 = vadd.f32 0.0, %v105
    %v107 = vpop.f32.mrb[0].mxu0
    %108 = vdwg.mxu0
    %vm109 = vcmask 195584
    %v111 = vsel %vm109, %v29, 0
    %113 = vmatprep.subr.mxu0 0.0
    %114 = vmatpush1.msra.mxu0 %v30
    %115 = vmatprep.subr.mxu0 0.0
    %116 = vmatpush1.msra.mxu0 %v31
    %117 = vmatprep.subr.mxu0 0.0
    %118 = vmatpush1.msra.mxu0 %v32
    %119 = vmatprep.subr.mxu0 0.0
    %120 = vmatpush1.msra.mxu0 0.0
    %121 = vmatprep.subr.mxu0 0.0
    %122 = vmatpush1.msra.mxu0 0.0
    %123 = vmatprep.subr.mxu0 0.0
    %124 = vmatpush1.msra.mxu0 0.0
    %125 = vmatprep.subr.mxu0 0.0
    %126 = vmatpush1.msra.mxu0 0.0
    %127 = vmatprep.subr.mxu0 0.0
    %128 = vmatpush1.msra.mxu0 0.0
    %129 = vmatprep.subr.mxu0 0.0
    %130 = vmatpush1.msra.mxu0 0.0
    %131 = vmatprep.subr.mxu0 0.0
    %132 = vmatpush1.msra.mxu0 0.0
    %133 = vmatprep.subr.mxu0 0.0
    %134 = vmatpush1.msra.mxu0 0.0
    %135 = vmatprep.subr.mxu0 0.0
    %136 = vmatpush1.msra.mxu0 0.0
    %137 = vmatprep.subr.mxu0 0.0
    %138 = vmatpush1.msra.mxu0 0.0
    %139 = vmatprep.subr.mxu0 0.0
    %140 = vmatpush1.msra.mxu0 0.0
    %141 = vmatprep.subr.mxu0 0.0
    %142 = vmatpush1.msra.mxu0 0.0
    %143 = vmatprep.subr.mxu0 0.0
    %144 = vmatpush1.msra.mxu0 0.0
    %145 = vmatprep.subr.mxu0 0.0
    %146 = vmatpush1.msra.mxu0 0.0
    %147 = vmatprep.subr.mxu0 0.0
    %148 = vmatpush1.msra.mxu0 0.0
    %149 = vmatprep.subr.mxu0 0.0
    %150 = vmatpush1.msra.mxu0 0.0
    %151 = vmatprep.subr.mxu0 0.0
    %152 = vmatpush1.msra.mxu0 0.0
    %153 = vmatprep.subr.mxu0 0.0
    %154 = vmatpush1.msra.mxu0 0.0
    %155 = vmatprep.subr.mxu0 0.0
    %156 = vmatpush1.msra.mxu0 0.0
    %157 = vmatprep.subr.mxu0 0.0
    %158 = vmatpush1.msra.mxu0 0.0
    %159 = vmatprep.subr.mxu0 0.0
    %160 = vmatpush1.msra.mxu0 0.0
    %161 = vmatprep.subr.mxu0 0.0
    %162 = vmatpush1.msra.mxu0 0.0
    %163 = vmatprep.subr.mxu0 0.0
    %164 = vmatpush1.msra.mxu0 0.0
    %165 = vmatprep.subr.mxu0 0.0
    %166 = vmatpush1.msra.mxu0 0.0
    %167 = vmatprep.subr.mxu0 0.0
    %168 = vmatpush1.msra.mxu0 0.0
    %169 = vmatprep.subr.mxu0 0.0
    %170 = vmatpush1.msra.mxu0 0.0
    %171 = vmatprep.subr.mxu0 0.0
    %172 = vmatpush1.msra.mxu0 0.0
    %173 = vmatprep.subr.mxu0 0.0
    %174 = vmatpush1.msra.mxu0 0.0
    %175 = vmatprep.subr.mxu0 0.0
    %176 = vmatpush1.msra.mxu0 0.0
    %177 = vmatprep.mubr.f32.mxu0 0.0
    %178 = vmatmul.mubr.f32.gmra.mrb[0].mxu0 %v111
    %v179 = vpop.f32.mrb[0].mxu0
    %v180 = vadd.f32 %v106, %v179
    %v181 = vpop.f32.mrb[0].mxu0
    %182 = vdwg.mxu0
    %v183 = vld [vmem:[#allocation2 + $0x20] sm:$0x1]
    %v184 = vadd.f32 %v180, %v183
    %v185 = vmax.f32 %v184, 0.0
    %s186 = scalar_lea.vmem [#allocation2], 40
    %v187 = vld [vmem:[%s186] sm:$0xff]
    %v188 = vld [vmem:[%s186 + $0x8] sm:$0xff]
    %v189 = vld [vmem:[%s186 + $0x10] sm:$0xff]
    %v190 = vld [vmem:[%s186 + $0x18] sm:$0xff]
    %v191 = vld [vmem:[%s186 + $0x20] sm:$0x1]
    %vm192 = vcmask 261120
    %v194 = vsel %vm192, %v185, 0
    %196 = vmatprep.subr.mxu0 0.0
    %197 = vmatpush1.msra.mxu0 %v187
    %198 = vmatprep.subr.mxu0 0.0
    %199 = vmatpush1.msra.mxu0 %v188
    %200 = vmatprep.subr.mxu0 0.0
    %201 = vmatpush1.msra.mxu0 %v189
    %202 = vmatprep.subr.mxu0 0.0
    %203 = vmatpush1.msra.mxu0 %v190
    %204 = vmatprep.subr.mxu0 0.0
    %205 = vmatpush1.msra.mxu0 0.0
    %206 = vmatprep.subr.mxu0 0.0
    %207 = vmatpush1.msra.mxu0 0.0
    %208 = vmatprep.subr.mxu0 0.0
    %209 = vmatpush1.msra.mxu0 0.0
    %210 = vmatprep.subr.mxu0 0.0
    %211 = vmatpush1.msra.mxu0 0.0
    %212 = vmatprep.subr.mxu0 0.0
    %213 = vmatpush1.msra.mxu0 0.0
    %214 = vmatprep.subr.mxu0 0.0
    %215 = vmatpush1.msra.mxu0 0.0
    %216 = vmatprep.subr.mxu0 0.0
    %217 = vmatpush1.msra.mxu0 0.0
    %218 = vmatprep.subr.mxu0 0.0
    %219 = vmatpush1.msra.mxu0 0.0
    %220 = vmatprep.subr.mxu0 0.0
    %221 = vmatpush1.msra.mxu0 0.0
    %222 = vmatprep.subr.mxu0 0.0
    %223 = vmatpush1.msra.mxu0 0.0
    %224 = vmatprep.subr.mxu0 0.0
    %225 = vmatpush1.msra.mxu0 0.0
    %226 = vmatprep.subr.mxu0 0.0
    %227 = vmatpush1.msra.mxu0 0.0
    %228 = vmatprep.subr.mxu0 0.0
    %229 = vmatpush1.msra.mxu0 0.0
    %230 = vmatprep.subr.mxu0 0.0
    %231 = vmatpush1.msra.mxu0 0.0
    %232 = vmatprep.subr.mxu0 0.0
    %233 = vmatpush1.msra.mxu0 0.0
    %234 = vmatprep.subr.mxu0 0.0
    %235 = vmatpush1.msra.mxu0 0.0
    %236 = vmatprep.subr.mxu0 0.0
    %237 = vmatpush1.msra.mxu0 0.0
    %238 = vmatprep.subr.mxu0 0.0
    %239 = vmatpush1.msra.mxu0 0.0
    %240 = vmatprep.subr.mxu0 0.0
    %241 = vmatpush1.msra.mxu0 0.0
    %242 = vmatprep.subr.mxu0 0.0
    %243 = vmatpush1.msra.mxu0 0.0
    %244 = vmatprep.subr.mxu0 0.0
    %245 = vmatpush1.msra.mxu0 0.0
    %246 = vmatprep.subr.mxu0 0.0
    %247 = vmatpush1.msra.mxu0 0.0
    %248 = vmatprep.subr.mxu0 0.0
    %249 = vmatpush1.msra.mxu0 0.0
    %250 = vmatprep.subr.mxu0 0.0
    %251 = vmatpush1.msra.mxu0 0.0
    %252 = vmatprep.subr.mxu0 0.0
    %253 = vmatpush1.msra.mxu0 0.0
    %254 = vmatprep.subr.mxu0 0.0
    %255 = vmatpush1.msra.mxu0 0.0
    %256 = vmatprep.subr.mxu0 0.0
    %257 = vmatpush1.msra.mxu0 0.0
    %258 = vmatprep.subr.mxu0 0.0
    %259 = vmatpush1.msra.mxu0 0.0
    %260 = vmatprep.mubr.f32.mxu0 0.0
    %261 = vmatmul.mubr.f32.gmra.mrb[0].mxu0 %v194
    %v262 = vpop.f32.mrb[0].mxu0
    %v263 = vadd.f32 %v191, %v262
    %v264 = vpop.f32.mrb[0].mxu0
    %265 = vdwg.mxu0
    %v266 = vmax.f32 %v263, 0.0
    %s267 = scalar_lea.vmem [#allocation2], 80
    %v268 = vld [vmem:[%s267] sm:$0xff]
    %v269 = vld [vmem:[%s267 + $0x8] sm:$0xff]
    %v270 = vld [vmem:[%s267 + $0x10] sm:$0xff]
    %v271 = vld [vmem:[%s267 + $0x18] sm:$0xff]
    %v272 = vld [vmem:[%s267 + $0x20] sm:$0x1]
    %v274 = vsel %vm192, %v266, 0
    %276 = vmatprep.subr.mxu0 0.0
    %277 = vmatpush1.msra.mxu0 %v268
    %278 = vmatprep.subr.mxu0 0.0
    %279 = vmatpush1.msra.mxu0 %v269
    %280 = vmatprep.subr.mxu0 0.0
    %281 = vmatpush1.msra.mxu0 %v270
    %282 = vmatprep.subr.mxu0 0.0
    %283 = vmatpush1.msra.mxu0 %v271
    %284 = vmatprep.subr.mxu0 0.0
    %285 = vmatpush1.msra.mxu0 0.0
    %286 = vmatprep.subr.mxu0 0.0
    %287 = vmatpush1.msra.mxu0 0.0
    %288 = vmatprep.subr.mxu0 0.0
    %289 = vmatpush1.msra.mxu0 0.0
    %290 = vmatprep.subr.mxu0 0.0
    %291 = vmatpush1.msra.mxu0 0.0
    %292 = vmatprep.subr.mxu0 0.0
    %293 = vmatpush1.msra.mxu0 0.0
    %294 = vmatprep.subr.mxu0 0.0
    %295 = vmatpush1.msra.mxu0 0.0
    %296 = vmatprep.subr.mxu0 0.0
    %297 = vmatpush1.msra.mxu0 0.0
    %298 = vmatprep.subr.mxu0 0.0
    %299 = vmatpush1.msra.mxu0 0.0
    %300 = vmatprep.subr.mxu0 0.0
    %301 = vmatpush1.msra.mxu0 0.0
    %302 = vmatprep.subr.mxu0 0.0
    %303 = vmatpush1.msra.mxu0 0.0
    %304 = vmatprep.subr.mxu0 0.0
    %305 = vmatpush1.msra.mxu0 0.0
    %306 = vmatprep.subr.mxu0 0.0
    %307 = vmatpush1.msra.mxu0 0.0
    %308 = vmatprep.subr.mxu0 0.0
    %309 = vmatpush1.msra.mxu0 0.0
    %310 = vmatprep.subr.mxu0 0.0
    %311 = vmatpush1.msra.mxu0 0.0
    %312 = vmatprep.subr.mxu0 0.0
    %313 = vmatpush1.msra.mxu0 0.0
    %314 = vmatprep.subr.mxu0 0.0
    %315 = vmatpush1.msra.mxu0 0.0
    %316 = vmatprep.subr.mxu0 0.0
    %317 = vmatpush1.msra.mxu0 0.0
    %318 = vmatprep.subr.mxu0 0.0
    %319 = vmatpush1.msra.mxu0 0.0
    %320 = vmatprep.subr.mxu0 0.0
    %321 = vmatpush1.msra.mxu0 0.0
    %322 = vmatprep.subr.mxu0 0.0
    %323 = vmatpush1.msra.mxu0 0.0
    %324 = vmatprep.subr.mxu0 0.0
    %325 = vmatpush1.msra.mxu0 0.0
    %326 = vmatprep.subr.mxu0 0.0
    %327 = vmatpush1.msra.mxu0 0.0
    %328 = vmatprep.subr.mxu0 0.0
    %329 = vmatpush1.msra.mxu0 0.0
    %330 = vmatprep.subr.mxu0 0.0
    %331 = vmatpush1.msra.mxu0 0.0
    %332 = vmatprep.subr.mxu0 0.0
    %333 = vmatpush1.msra.mxu0 0.0
    %334 = vmatprep.subr.mxu0 0.0
    %335 = vmatpush1.msra.mxu0 0.0
    %336 = vmatprep.subr.mxu0 0.0
    %337 = vmatpush1.msra.mxu0 0.0
    %338 = vmatprep.subr.mxu0 0.0
    %339 = vmatpush1.msra.mxu0 0.0
    %340 = vmatprep.mubr.f32.mxu0 0.0
    %341 = vmatmul.mubr.f32.gmra.mrb[0].mxu0 %v274
    %v342 = vpop.f32.mrb[0].mxu0
    %v343 = vadd.f32 %v272, %v342
    %v344 = vpop.f32.mrb[0].mxu0
    %345 = vdwg.mxu0
    %346 = vst [vmem:[#allocation5] sm:$0x1] %v343
    // Predicated region
    $region18: #{td3_value_forward.1} parent=1 // pred_check
      _
    $region19: #{td3_value_forward.1} parent=1 // pred_check_branch
      %348 = sbr.rel (0) target = $region21
    $region20: #{td3_value_forward.1} parent=1 // pred_region
      %s350 = ssub.s32 16, 16
      %351 = vsyncadd [#allocation4], %s350
      %s353 = sshll.u32 [#allocation5], 4
      %s354 = int_to_ptr.vmem [resolvable:$true] %s353
      %356 = dma.vmem_to_hbm [thread:$0]  %s354, 16, %s3, [#allocation4]
    $region21: #{td3_value_forward.1} parent=1 // pred_fallthru
      _
    // Predicated region
    $region22: #{td3_value_forward.1} parent=1 // pred_check
      _
    $region23: #{td3_value_forward.1} parent=1 // pred_check_branch
      %358 = sbr.rel (0) target = $region25
    $region24: #{td3_value_forward.1} parent=1 // pred_region
      %359 = dma.done [#allocation4], 16
    $region25: #{td3_value_forward.1} parent=1 // pred_fallthru
      _
    %360 = vsyncpa [#allocation3], 1
    %361 = vsyncpa [#allocation4], 1

</llo_original>
